<compile_context>
chip_gen: v7x
topology: tpu7x:2x2x1
jax: 0.10.0
libtpu: 0.0.40
codegen_flags: <defaults>
</compile_context>

<pallas_src>
import functools

import jax
import jax.numpy as jnp
from jax import lax
from jax.experimental import pallas as pl
from jax.experimental.pallas import tpu as pltpu

TM = 256                              # out-row tile (MXU M dim on v6e/v7x; fine on v5e)
VMEM_LIMIT_BYTES = 32 * 1024 * 1024   # actual need < ~10 MiB; safe on v7x's 64 MiB VMEM


def _pick_tile(n_pad, candidates=(2048, 1024, 512, 256)):
    # largest candidate tile that evenly divides the (TM-aligned) padded row count
    for t in candidates:
        if n_pad % t == 0:
            return t
    return n_pad


def _apply_act(z, activation):
    if activation == "relu":
        return jnp.maximum(z, 0.0)
    if activation == "sigmoid":
        return jax.nn.sigmoid(z)
    if activation == "log_softmax":
        m = jnp.max(z, axis=-1, keepdims=True)
        e = jnp.exp(z - m)
        return (z - m) - jnp.log(jnp.sum(e, axis=-1, keepdims=True))
    return z


# ---------------------- fused linear (+ bias + activation) -------------------


def _linear_kernel(x_ref, w_ref, b_ref, o_ref, *, activation):
    # one row-tile of X @ W + b with fused activation (MXU matmul + VPU/EUP epilogue)
    z = jnp.dot(x_ref[...], w_ref[...], preferred_element_type=jnp.float32)
    z = z + b_ref[...]
    o_ref[...] = _apply_act(z, activation).astype(o_ref.dtype)


def linear_act(x, w, b, activation="none"):
    """act(x @ w + b). Rows are pre-padded to a multiple of TM; the row tile here is
    much larger than TM so each grid step moves enough bytes to amortize overhead."""
    n, k = x.shape
    k2, m = w.shape
    assert k == k2
    lt = _pick_tile(n, candidates=(4096, 2048, 1024, 512, 256))
    assert n % lt == 0
    return pl.pallas_call(
        functools.partial(_linear_kernel, activation=activation),
        out_shape=jax.ShapeDtypeStruct((n, m), jnp.float32),
        grid_spec=pltpu.PrefetchScalarGridSpec(
            num_scalar_prefetch=0,
            grid=(n // lt,),
            in_specs=[
                pl.BlockSpec((lt, k), lambda i: (i, 0)),   # row tile of X
                pl.BlockSpec((k, m), lambda i: (0, 0)),    # full W (resident)
                pl.BlockSpec((1, m), lambda i: (0, 0)),    # bias (resident)
            ],
            out_specs=pl.BlockSpec((lt, m), lambda i: (i, 0)),
        ),
        compiler_params=pltpu.CompilerParams(
            dimension_semantics=("parallel",),
            vmem_limit_bytes=VMEM_LIMIT_BYTES,
        ),
    )(x, w, b.reshape(1, m))


# --- fused CCN1D layer: fwd + reversed contraction + normalize + message MLPs ---


def _layer_kernel(*refs, activation, n_w):
    # refs layout:
    #   adj_f(TM,TK) i8, adj_r(TK,TM) i8 (same HBM array, transposed block indices),
    #   invdeg_f(TM,1), invdeg_r(TM,1),
    #   hself_f(TM,d), hk_f(TK,d), hself_r(TM,d), hk_r(TK,d),
    #   wf[0..n_w-1], wr[0..n_w-1],
    #   out_f(TM,out_d), out_r(TM,out_d), acc_f(TM,d) scratch, acc_r(TM,d) scratch
    (adj_f_ref, adj_r_ref, invd_f_ref, invd_r_ref,
     hself_f_ref, hk_f_ref, hself_r_ref, hk_r_ref) = refs[:8]
    wf = refs[8:8 + n_w]
    wr = refs[8 + n_w:8 + 2 * n_w]
    out_f_ref, out_r_ref = refs[8 + 2 * n_w:10 + 2 * n_w]
    acc_f_ref, acc_r_ref = refs[10 + 2 * n_w:12 + 2 * n_w]

    k = pl.program_id(1)

    @pl.when(k == 0)
    def _():
        acc_f_ref[...] = jnp.zeros_like(acc_f_ref)
        acc_r_ref[...] = jnp.zeros_like(acc_r_ref)

    # int8 adjacency -> bf16 in VMEM (i8 -> f32 -> bf16 cast chain, portable on all
    # generations); neighbor-sum contractions accumulated over K tiles in f32.
    a_f = adj_f_ref[...].astype(jnp.float32).astype(jnp.bfloat16)      # (TM, TK)
    a_r = adj_r_ref[...].astype(jnp.float32).astype(jnp.bfloat16)      # (TK, TM)
    hk_f = hk_f_ref[...].astype(jnp.bfloat16)                          # (TK, d)
    hk_r = hk_r_ref[...].astype(jnp.bfloat16)                          # (TK, d)
    acc_f_ref[...] += jnp.dot(a_f, hk_f, preferred_element_type=jnp.float32)
    # reversed edges: adj_rev == adj.T, so contract the same adjacency along axis 0
    acc_r_ref[...] += lax.dot_general(
        a_r, hk_r, (((0,), (0,)), ((), ())), preferred_element_type=jnp.float32)

    @pl.when(k == pl.num_programs(1) - 1)
    def _():
        def mlp(h_self, acc, invd, ws):
            nb = acc * invd                     # normalizing (precomputed 1/deg)
            # first MLP matmul on split weights == matmul of concat([self, nb], axis=1)
            z = (jnp.dot(h_self, ws[0][...], preferred_element_type=jnp.float32)
                 + jnp.dot(nb, ws[1][...], preferred_element_type=jnp.float32))
            z = _apply_act(z, activation)
            for w_ref in ws[2:]:                # rest of the message MLP, in-VMEM
                z = jnp.dot(z, w_ref[...], preferred_element_type=jnp.float32)
                z = _apply_act(z, activation)   # torch activates the last matmul too
            return z

        out_f_ref[...] = mlp(hself_f_ref[...], acc_f_ref[...], invd_f_ref[...],
                             wf).astype(out_f_ref.dtype)
        out_r_ref[...] = mlp(hself_r_ref[...], acc_r_ref[...], invd_r_ref[...],
                             wr).astype(out_r_ref.dtype)


def fused_message_layer(adj_i8, inv_deg_f, inv_deg_r, h_f, h_r,
                        weights_f, weights_r, activation):
    """One CCN1D message-passing layer for BOTH edge directions in a single
    pallas_call: contraction + normalize + message MLPs, sharing one int8 adjacency
    array in HBM (the reversed direction indexes it with transposed block indices)."""
    n, d = h_f.shape
    assert adj_i8.shape == (n, n) and h_r.shape == (n, d) and n % TM == 0
    tk = _pick_tile(n)

    def split_w0(weights):
        w0 = weights[0]
        # TODO(synk): assumes the C++ contraction order is [self, neighbor].
        assert w0.shape[0] == 2 * d            # nContractions == 2
        return [w0[:d], w0[d:]] + list(weights[1:])

    wf = split_w0(weights_f)
    wr = split_w0(weights_r)
    n_w = len(wf)
    out_d = weights_f[-1].shape[1]

    in_specs = [
        pl.BlockSpec((TM, tk), lambda i, k: (i, k)),   # adjacency tile (forward edges)
        pl.BlockSpec((tk, TM), lambda i, k: (k, i)),   # same adjacency, transposed idx
        pl.BlockSpec((TM, 1), lambda i, k: (i, 0)),    # 1/deg forward rows
        pl.BlockSpec((TM, 1), lambda i, k: (i, 0)),    # 1/deg reversed rows
        pl.BlockSpec((TM, d), lambda i, k: (i, 0)),    # h_f self rows (idx fixed over k)
        pl.BlockSpec((tk, d), lambda i, k: (k, 0)),    # h_f K-slab
        pl.BlockSpec((TM, d), lambda i, k: (i, 0)),    # h_r self rows
        pl.BlockSpec((tk, d), lambda i, k: (k, 0)),    # h_r K-slab
    ] + [pl.BlockSpec(w.shape, lambda i, k: (0, 0)) for w in wf + wr]  # resident weights

    out_f, out_r = pl.pallas_call(
        functools.partial(_layer_kernel, activation=activation, n_w=n_w),
        out_shape=(jax.ShapeDtypeStruct((n, out_d), jnp.float32),
                   jax.ShapeDtypeStruct((n, out_d), jnp.float32)),
        grid_spec=pltpu.PrefetchScalarGridSpec(
            num_scalar_prefetch=0,
            grid=(n // TM, n // tk),                   # rows parallel, neighbor-K last
            in_specs=in_specs,
            out_specs=(pl.BlockSpec((TM, out_d), lambda i, k: (i, 0)),
                       pl.BlockSpec((TM, out_d), lambda i, k: (i, 0))),
            scratch_shapes=[pltpu.VMEM((TM, d), jnp.float32),   # fwd neighbor-sum acc
                            pltpu.VMEM((TM, d), jnp.float32)],  # rev neighbor-sum acc
        ),
        compiler_params=pltpu.CompilerParams(
            dimension_semantics=("parallel", "arbitrary"),
            vmem_limit_bytes=VMEM_LIMIT_BYTES,
        ),
    )(adj_i8, adj_i8, inv_deg_f, inv_deg_r, h_f, h_f, h_r, h_r, *wf, *wr)
    return out_f, out_r


# ------------------------------- CCN1D forward -------------------------------


def preprocess_graph(adj, sparse_feature):
    """One-time per-graph preprocessing (hoisted out of the forward pass):
    pad to the row tile, store the 0/1 adjacency as int8 (adj_rev is NOT
    materialized), and precompute reciprocal degrees for both edge directions."""
    n = sparse_feature.shape[0]
    n_pad = pl.cdiv(n, TM) * TM
    pad = n_pad - n
    if pad:
        # padded adjacency rows/cols stay zero so padded nodes never contribute
        adj = jnp.pad(adj, ((0, pad), (0, pad)))
        sparse_feature = jnp.pad(sparse_feature, ((0, pad), (0, 0)))
    adj_i8 = adj.astype(jnp.int8)
    deg_f = jnp.sum(adj, axis=1, keepdims=True)        # out-degree (forward rf size)
    deg_r = jnp.sum(adj, axis=0, keepdims=True).T      # in-degree  (reversed rf size)
    inv_deg_f = 1.0 / jnp.clip(deg_f, 1.0, None)
    inv_deg_r = 1.0 / jnp.clip(deg_r, 1.0, None)
    return adj_i8, inv_deg_f, inv_deg_r, sparse_feature, n


def ccn1d_forward(params, graph, mask, activation="relu"):
    adj_i8, inv_deg_f, inv_deg_r, sparse_feature, n = graph

    # dense_feature = activation(fully_connected_1(sparse_feature))
    dense_feature = linear_act(sparse_feature, params["w1"], params["b1"], activation)

    n_layers = len(params["message_weights"])
    shrinked_message, shrinked_message_reversed = [], []
    h_f = h_r = dense_feature
    for layer in range(n_layers):
        h_f, h_r = fused_message_layer(
            adj_i8, inv_deg_f, inv_deg_r, h_f, h_r,
            params["message_weights"][layer],
            params["message_reversed_weights"][layer],
            activation)
        # TODO(synk): ccn1d_shrinking.apply approximated as identity (messages are
        #             already per-node in this dense node-level formulation).
        shrinked_message.append(h_f)
        shrinked_message_reversed.append(h_r)

    total_representation = jnp.concatenate(
        [dense_feature] + shrinked_message + shrinked_message_reversed, axis=1)

    # fully_connected_2 + log_softmax fused over all aligned (padded) rows,
    # then boolean row selection on the result (row-wise op, order doesn't matter).
    # TODO(synk): boolean select is eager (dynamic shape); under jax.jit use a
    #             fixed-size jnp.nonzero(mask, size=...) gather instead.
    logits = linear_act(total_representation, params["w2"], params["b2"], "log_softmax")
    return logits[:n][mask]


# ------------------------------ setup / main ---------------------------------


def init_params(key, input_size, message_sizes, message_mlp_sizes, num_classes,
                n_contractions):
    keys = iter(jax.random.split(key, 64))
    params = {}
    params["w1"] = 0.1 * jax.random.normal(next(keys), (input_size[0], input_size[1]),
                                           jnp.float32)
    params["b1"] = 0.1 * jax.random.normal(next(keys), (input_size[1],), jnp.float32)

    msg_w, msg_rw = [], []
    for layer in range(len(message_sizes)):
        d1 = (input_size[1] if layer == 0 else message_sizes[layer - 1]) * n_contractions
        d2 = message_sizes[layer]
        ws, rws = [], []
        for l in range(len(message_mlp_sizes) + 1):
            n1 = d1 if l == 0 else message_mlp_sizes[l - 1]
            n2 = d2 if l == len(message_mlp_sizes) else message_mlp_sizes[l]
            ws.append(jax.random.normal(next(keys), (n1, n2), jnp.float32))
            rws.append(jax.random.normal(next(keys), (n1, n2), jnp.float32))
        msg_w.append(ws)
        msg_rw.append(rws)
    params["message_weights"] = msg_w
    params["message_reversed_weights"] = msg_rw

    num_final_features = input_size[1] + 2 * sum(message_sizes)
    params["w2"] = 0.1 * jax.random.normal(next(keys), (num_final_features, num_classes),
                                           jnp.float32)
    params["b2"] = 0.1 * jax.random.normal(next(keys), (num_classes,), jnp.float32)
    return params


if __name__ == "__main__":
    key = jax.random.PRNGKey(0)
    k_param, k_feat = jax.random.split(key)

    # module configuration (small, consistent with __init__)
    input_size = (16, 8)          # (sparse feature dim, dense feature dim)
    message_sizes = [8, 8]        # 2 message-passing layers
    message_mlp_sizes = [16]      # 1 hidden layer in each message MLP
    num_classes = 4
    n_contractions = 2            # ccn1d_lib.get_nContractions()  (see TODO above)
    n_papers = 32

    params = init_params(k_param, input_size, message_sizes, message_mlp_sizes,
                         num_classes, n_contractions)

    # synthetic directed graph: ring + skip-3 edges
    src = jnp.concatenate([jnp.arange(n_papers), jnp.arange(n_papers)])
    dst = jnp.concatenate([(jnp.arange(n_papers) + 1) % n_papers,
                           (jnp.arange(n_papers) + 3) % n_papers])
    adj = jnp.zeros((n_papers, n_papers), jnp.float32).at[src, dst].set(1.0)
    # reversed_edges_tensor is NOT materialized: the kernel reads adj with
    # transposed block indices.

    sparse_feature = jax.random.normal(k_feat, (n_papers, input_size[0]), jnp.float32)
    train_mask = jnp.arange(n_papers) < 16  # data.train_mask

    graph = preprocess_graph(adj, sparse_feature)   # once-per-graph n^2 preprocessing
    out = ccn1d_forward(params, graph, train_mask, activation="relu")
    out = jax.block_until_ready(out)

    expected_features = input_size[1] + 2 * sum(message_sizes)  # 40
    assert params["w2"].shape[0] == expected_features
    assert out.shape == (int(train_mask.sum()), num_classes)
    assert bool(jnp.all(jnp.isfinite(out)))
    # log_softmax rows sum to 1 in prob space
    assert bool(jnp.allclose(jnp.sum(jnp.exp(out), axis=-1), 1.0, atol=1e-4))
    print("KERNEL_OK")
</pallas_src>

<mosaic_0001>
module attributes {stable_mosaic.version = 11 : i64} {
  func.func @_linear_kernel(%arg0: i32, %arg1: memref<256x16xf32, #tpu.memory_space<vmem>>, %arg2: memref<16x8xf32, #tpu.memory_space<vmem>>, %arg3: memref<1x8xf32, #tpu.memory_space<vmem>>, %arg4: memref<256x8xf32, #tpu.memory_space<vmem>>) attributes {dimension_semantics = [#tpu.dimension_semantics<parallel>], iteration_bounds = array<i64: 1>, scalar_prefetch = 0 : i64, scratch_operands = 0 : i64, tpu.core_type = #tpu.core_type<tc>, window_params = [{transform_indices = @transform_0, window_bounds = array<i64: 256, 16>}, {pipeline_mode = #tpu.pipeline_mode<synchronous>, transform_indices = @transform_1, window_bounds = array<i64: 16, 8>}, {pipeline_mode = #tpu.pipeline_mode<synchronous>, transform_indices = @transform_2, window_bounds = array<i64: 1, 8>}, {transform_indices = @transform_3, window_bounds = array<i64: 256, 8>}]} {
    %c0 = arith.constant 0 : index
    %c0_0 = arith.constant 0 : index
    %0 = vector.load %arg1[%c0, %c0_0] : memref<256x16xf32, #tpu.memory_space<vmem>>, vector<256x16xf32>
    %c0_1 = arith.constant 0 : index
    %c0_2 = arith.constant 0 : index
    %1 = vector.load %arg2[%c0_1, %c0_2] : memref<16x8xf32, #tpu.memory_space<vmem>>, vector<16x8xf32>
    %cst = arith.constant dense<0.000000e+00> : vector<256x8xf32>
    %2 = tpu.matmul %0, %1, %cst {dimension_numbers = #tpu.dot_dimension_numbers<[1], [0], [0], [1], [0, 0, 1, 1], [], []>} : vector<256x16xf32>, vector<16x8xf32>, vector<256x8xf32> -> vector<256x8xf32>
    %c0_3 = arith.constant 0 : index
    %c0_4 = arith.constant 0 : index
    %3 = vector.load %arg3[%c0_3, %c0_4] : memref<1x8xf32, #tpu.memory_space<vmem>>, vector<1x8xf32>
    %4 = vector.broadcast %3 : vector<1x8xf32> to vector<256x8xf32>
    %5 = arith.addf %2, %4 : vector<256x8xf32>
    %cst_5 = arith.constant 0.000000e+00 : f32
    %6 = vector.broadcast %cst_5 : f32 to vector<256x8xf32>
    %7 = arith.maximumf %5, %6 : vector<256x8xf32>
    %c0_6 = arith.constant 0 : index
    %c0_7 = arith.constant 0 : index
    %8 = vector.load %arg4[%c0_6, %c0_7] : memref<256x8xf32, #tpu.memory_space<vmem>>, vector<256x8xf32>
    tpu.vector_store %arg4[%c0_6, %c0_7], %7 {strides = array<i32>} : memref<256x8xf32, #tpu.memory_space<vmem>>, vector<256x8xf32>,
    return
  }
  func.func @transform_0(%arg0: i32) -> (i32, i32) {
    %c0_i32 = arith.constant 0 : i32
    %c0_i32_0 = arith.constant 0 : i32
    return %arg0, %c0_i32 : i32, i32
  }
  func.func @transform_1(%arg0: i32) -> (i32, i32) {
    %c0_i32 = arith.constant 0 : i32
    %c0_i32_0 = arith.constant 0 : i32
    %c0_i32_1 = arith.constant 0 : i32
    return %c0_i32, %c0_i32_0 : i32, i32
  }
  func.func @transform_2(%arg0: i32) -> (i32, i32) {
    %c0_i32 = arith.constant 0 : i32
    %c0_i32_0 = arith.constant 0 : i32
    %c0_i32_1 = arith.constant 0 : i32
    return %c0_i32, %c0_i32_0 : i32, i32
  }
  func.func @transform_3(%arg0: i32) -> (i32, i32) {
    %c0_i32 = arith.constant 0 : i32
    %c0_i32_0 = arith.constant 0 : i32
    return %arg0, %c0_i32 : i32, i32
  }
}

</mosaic_0001>

<llo_original>
// kernel: tpu_custom_call.1
$region0: #{tpu_custom_call.1}
  #allocation0 [shape = 'u32[]', space=smem, size = 0x4, offset = 0x4, fixed_abs, tag = 'smem constant byte address 0x4 - core index']
  #allocation1 [shape = 'u32[144,128]{1,0:T(1,128)}', space=vmem, size = 0x12000, scoped, tag = 'internal scratch']
  %s0 = inlined_call_operand.vmem [shape: f32[256,16], index: 0, kind: input, shape index: {}]
  %s1 = inlined_call_operand.vmem [shape: f32[16,8], index: 1, kind: input, shape index: {}]
  %s2 = inlined_call_operand.vmem [shape: f32[1,8], index: 2, kind: input, shape index: {}]
  %s3 = inlined_call_operand.vmem [shape: f32[256,8], index: 3, kind: output, shape index: {}]
  %s4 = sld [smem:[#allocation0]]
  $region22: #{tpu_custom_call.1} parent=0
    _
  %s6 = ssub.s32 1, %s4
  %s7 = scalar_select 0, %s6, %s4
  // Predicated region
  $region2: #{tpu_custom_call.1} parent=0 // pred_check
    _
  $region3: #{tpu_custom_call.1} parent=0 // pred_check_branch
    %9 = sbr.rel (0) target = $region5
  $region4: #{tpu_custom_call.1} parent=0 // pred_region
    _
  $region5: #{tpu_custom_call.1} parent=0 // pred_fallthru
    _
  // Predicated region
  $region6: #{tpu_custom_call.1} parent=0 // pred_check
    _
  $region7: #{tpu_custom_call.1} parent=0 // pred_check_branch
    %11 = sbr.rel (0) target = $region9
  $region8: #{tpu_custom_call.1} parent=0 // pred_region
    _
  $region9: #{tpu_custom_call.1} parent=0 // pred_fallthru
    _
  // Predicated region
  $region10: #{tpu_custom_call.1} parent=0 // pred_check
    _
  $region11: #{tpu_custom_call.1} parent=0 // pred_check_branch
    %13 = sbr.rel (0) target = $region13
  $region12: #{tpu_custom_call.1} parent=0 // pred_region
    _
  $region13: #{tpu_custom_call.1} parent=0 // pred_fallthru
    _
  %v14 = vld [vmem:[%s0] sm:$0xff]
  %v15 = vld [vmem:[%s0 + $0x8] sm:$0xff]
  %v16 = vld [vmem:[%s0 + $0x10] sm:$0xff]
  %v17 = vld [vmem:[%s0 + $0x18] sm:$0xff]
  %v18 = vld [vmem:[%s0 + $0x20] sm:$0xff]
  %v19 = vld [vmem:[%s0 + $0x28] sm:$0xff]
  %v20 = vld [vmem:[%s0 + $0x30] sm:$0xff]
  %v21 = vld [vmem:[%s0 + $0x38] sm:$0xff]
  %v22 = vld [vmem:[%s0 + $0x40] sm:$0xff]
  %v23 = vld [vmem:[%s0 + $0x48] sm:$0xff]
  %v24 = vld [vmem:[%s0 + $0x50] sm:$0xff]
  %v25 = vld [vmem:[%s0 + $0x58] sm:$0xff]
  %v26 = vld [vmem:[%s0 + $0x60] sm:$0xff]
  %v27 = vld [vmem:[%s0 + $0x68] sm:$0xff]
  %v28 = vld [vmem:[%s0 + $0x70] sm:$0xff]
  %v29 = vld [vmem:[%s0 + $0x78] sm:$0xff]
  %v30 = vld [vmem:[%s0 + $0x80] sm:$0xff]
  %v31 = vld [vmem:[%s0 + $0x88] sm:$0xff]
  %v32 = vld [vmem:[%s0 + $0x90] sm:$0xff]
  %v33 = vld [vmem:[%s0 + $0x98] sm:$0xff]
  %v34 = vld [vmem:[%s0 + $0xa0] sm:$0xff]
  %v35 = vld [vmem:[%s0 + $0xa8] sm:$0xff]
  %v36 = vld [vmem:[%s0 + $0xb0] sm:$0xff]
  %v37 = vld [vmem:[%s0 + $0xb8] sm:$0xff]
  %v38 = vld [vmem:[%s0 + $0xc0] sm:$0xff]
  %v39 = vld [vmem:[%s0 + $0xc8] sm:$0xff]
  %v40 = vld [vmem:[%s0 + $0xd0] sm:$0xff]
  %v41 = vld [vmem:[%s0 + $0xd8] sm:$0xff]
  %v42 = vld [vmem:[%s0 + $0xe0] sm:$0xff]
  %v43 = vld [vmem:[%s0 + $0xe8] sm:$0xff]
  %v44 = vld [vmem:[%s0 + $0xf0] sm:$0xff]
  %v45 = vld [vmem:[%s0 + $0xf8] sm:$0xff]
  %v46 = vld [vmem:[%s1] sm:$0xff]
  %v47 = vld [vmem:[%s1 + $0x8] sm:$0xff]
  %v48 = vld [vmem:[%s2] sm:$0x1]
  %v50 = vlaneseq
  %v51 = vshrl.u32 %v50, 7
  %v52 = vsub.s32 0, %v51
  %v53 = vrot.slane %v48, %v52
  %vm55 = vcmask 130048
  %v57 = vsel %vm55, %v14, 0
  %v60 = vsel %vm55, %v15, 0
  %v63 = vsel %vm55, %v16, 0
  %v66 = vsel %vm55, %v17, 0
  %v69 = vsel %vm55, %v18, 0
  %v72 = vsel %vm55, %v19, 0
  %v75 = vsel %vm55, %v20, 0
  %v78 = vsel %vm55, %v21, 0
  %v81 = vsel %vm55, %v22, 0
  %v84 = vsel %vm55, %v23, 0
  %v87 = vsel %vm55, %v24, 0
  %v90 = vsel %vm55, %v25, 0
  %v93 = vsel %vm55, %v26, 0
  %v96 = vsel %vm55, %v27, 0
  %v99 = vsel %vm55, %v28, 0
  %v102 = vsel %vm55, %v29, 0
  %v105 = vsel %vm55, %v30, 0
  %v108 = vsel %vm55, %v31, 0
  %v111 = vsel %vm55, %v32, 0
  %v114 = vsel %vm55, %v33, 0
  %v117 = vsel %vm55, %v34, 0
  %v120 = vsel %vm55, %v35, 0
  %v123 = vsel %vm55, %v36, 0
  %v126 = vsel %vm55, %v37, 0
  %v129 = vsel %vm55, %v38, 0
  %v132 = vsel %vm55, %v39, 0
  %v135 = vsel %vm55, %v40, 0
  %v138 = vsel %vm55, %v41, 0
  %v141 = vsel %vm55, %v42, 0
  %v144 = vsel %vm55, %v43, 0
  %v147 = vsel %vm55, %v44, 0
  %v150 = vsel %vm55, %v45, 0
  %152 = vmatprep.subr.mxu0 0.0
  %153 = vmatpush1.msra.mxu0 %v46
  %154 = vmatprep.subr.mxu0 0.0
  %155 = vmatpush1.msra.mxu0 %v47
  %156 = vmatprep.subr.mxu0 0.0
  %157 = vmatpush1.msra.mxu0 0.0
  %158 = vmatprep.subr.mxu0 0.0
  %159 = vmatpush1.msra.mxu0 0.0
  %160 = vmatprep.subr.mxu0 0.0
  %161 = vmatpush1.msra.mxu0 0.0
  %162 = vmatprep.subr.mxu0 0.0
  %163 = vmatpush1.msra.mxu0 0.0
  %164 = vmatprep.subr.mxu0 0.0
  %165 = vmatpush1.msra.mxu0 0.0
  %166 = vmatprep.subr.mxu0 0.0
  %167 = vmatpush1.msra.mxu0 0.0
  %168 = vmatprep.subr.mxu0 0.0
  %169 = vmatpush1.msra.mxu0 0.0
  %170 = vmatprep.subr.mxu0 0.0
  %171 = vmatpush1.msra.mxu0 0.0
  %172 = vmatprep.subr.mxu0 0.0
  %173 = vmatpush1.msra.mxu0 0.0
  %174 = vmatprep.subr.mxu0 0.0
  %175 = vmatpush1.msra.mxu0 0.0
  %176 = vmatprep.subr.mxu0 0.0
  %177 = vmatpush1.msra.mxu0 0.0
  %178 = vmatprep.subr.mxu0 0.0
  %179 = vmatpush1.msra.mxu0 0.0
  %180 = vmatprep.subr.mxu0 0.0
  %181 = vmatpush1.msra.mxu0 0.0
  %182 = vmatprep.subr.mxu0 0.0
  %183 = vmatpush1.msra.mxu0 0.0
  %184 = vmatprep.subr.mxu0 0.0
  %185 = vmatpush1.msra.mxu0 0.0
  %186 = vmatprep.subr.mxu0 0.0
  %187 = vmatpush1.msra.mxu0 0.0
  %188 = vmatprep.subr.mxu0 0.0
  %189 = vmatpush1.msra.mxu0 0.0
  %190 = vmatprep.subr.mxu0 0.0
  %191 = vmatpush1.msra.mxu0 0.0
  %192 = vmatprep.subr.mxu0 0.0
  %193 = vmatpush1.msra.mxu0 0.0
  %194 = vmatprep.subr.mxu0 0.0
  %195 = vmatpush1.msra.mxu0 0.0
  %196 = vmatprep.subr.mxu0 0.0
  %197 = vmatpush1.msra.mxu0 0.0
  %198 = vmatprep.subr.mxu0 0.0
  %199 = vmatpush1.msra.mxu0 0.0
  %200 = vmatprep.subr.mxu0 0.0
  %201 = vmatpush1.msra.mxu0 0.0
  %202 = vmatprep.subr.mxu0 0.0
  %203 = vmatpush1.msra.mxu0 0.0
  %204 = vmatprep.subr.mxu0 0.0
  %205 = vmatpush1.msra.mxu0 0.0
  %206 = vmatprep.subr.mxu0 0.0
  %207 = vmatpush1.msra.mxu0 0.0
  %208 = vmatprep.subr.mxu0 0.0
  %209 = vmatpush1.msra.mxu0 0.0
  %210 = vmatprep.subr.mxu0 0.0
  %211 = vmatpush1.msra.mxu0 0.0
  %212 = vmatprep.subr.mxu0 0.0
  %213 = vmatpush1.msra.mxu0 0.0
  %214 = vmatprep.subr.mxu0 0.0
  %215 = vmatpush1.msra.mxu0 0.0
  %216 = vmatprep.mubr.f32.mxu0 0.0
  %217 = vmatmul.mubr.f32.gmra.mrb[0].mxu0 %v57
  %v218 = vpop.f32.mrb[0].mxu0
  %v219 = vadd.f32 %v53, %v218
  %v220 = vpop.f32.mrb[0].mxu0
  %221 = vmatprep.mubr.f32.mxu0 0.0
  %222 = vmatmul.mubr.f32.gmra.mrb[0].mxu0 %v60
  %v223 = vpop.f32.mrb[0].mxu0
  %v224 = vadd.f32 %v53, %v223
  %v225 = vpop.f32.mrb[0].mxu0
  %226 = vmatprep.mubr.f32.mxu0 0.0
  %227 = vmatmul.mubr.f32.gmra.mrb[0].mxu0 %v63
  %v228 = vpop.f32.mrb[0].mxu0
  %v229 = vadd.f32 %v53, %v228
  %v230 = vpop.f32.mrb[0].mxu0
  %231 = vmatprep.mubr.f32.mxu0 0.0
  %232 = vmatmul.mubr.f32.gmra.mrb[0].mxu0 %v66
  %v233 = vpop.f32.mrb[0].mxu0
  %v234 = vadd.f32 %v53, %v233
  %v235 = vpop.f32.mrb[0].mxu0
  %236 = vmatprep.mubr.f32.mxu0 0.0
  %237 = vmatmul.mubr.f32.gmra.mrb[0].mxu0 %v69
  %v238 = vpop.f32.mrb[0].mxu0
  %v239 = vadd.f32 %v53, %v238
  %v240 = vpop.f32.mrb[0].mxu0
  %241 = vmatprep.mubr.f32.mxu0 0.0
  %242 = vmatmul.mubr.f32.gmra.mrb[0].mxu0 %v72
  %v243 = vpop.f32.mrb[0].mxu0
  %v244 = vadd.f32 %v53, %v243
  %v245 = vpop.f32.mrb[0].mxu0
  %246 = vmatprep.mubr.f32.mxu0 0.0
  %247 = vmatmul.mubr.f32.gmra.mrb[0].mxu0 %v75
  %v248 = vpop.f32.mrb[0].mxu0
  %v249 = vadd.f32 %v53, %v248
  %v250 = vpop.f32.mrb[0].mxu0
  %251 = vmatprep.mubr.f32.mxu0 0.0
  %252 = vmatmul.mubr.f32.gmra.mrb[0].mxu0 %v78
  %v253 = vpop.f32.mrb[0].mxu0
  %v254 = vadd.f32 %v53, %v253
  %v255 = vpop.f32.mrb[0].mxu0
  %256 = vmatprep.mubr.f32.mxu0 0.0
  %257 = vmatmul.mubr.f32.gmra.mrb[0].mxu0 %v81
  %v258 = vpop.f32.mrb[0].mxu0
  %v259 = vadd.f32 %v53, %v258
  %v260 = vpop.f32.mrb[0].mxu0
  %261 = vmatprep.mubr.f32.mxu0 0.0
  %262 = vmatmul.mubr.f32.gmra.mrb[0].mxu0 %v84
  %v263 = vpop.f32.mrb[0].mxu0
  %v264 = vadd.f32 %v53, %v263
  %v265 = vpop.f32.mrb[0].mxu0
  %266 = vmatprep.mubr.f32.mxu0 0.0
  %267 = vmatmul.mubr.f32.gmra.mrb[0].mxu0 %v87
  %v268 = vpop.f32.mrb[0].mxu0
  %v269 = vadd.f32 %v53, %v268
  %v270 = vpop.f32.mrb[0].mxu0
  %271 = vmatprep.mubr.f32.mxu0 0.0
  %272 = vmatmul.mubr.f32.gmra.mrb[0].mxu0 %v90
  %v273 = vpop.f32.mrb[0].mxu0
  %v274 = vadd.f32 %v53, %v273
  %v275 = vpop.f32.mrb[0].mxu0
  %276 = vmatprep.mubr.f32.mxu0 0.0
  %277 = vmatmul.mubr.f32.gmra.mrb[0].mxu0 %v93
  %v278 = vpop.f32.mrb[0].mxu0
  %v279 = vadd.f32 %v53, %v278
  %v280 = vpop.f32.mrb[0].mxu0
  %281 = vmatprep.mubr.f32.mxu0 0.0
  %282 = vmatmul.mubr.f32.gmra.mrb[0].mxu0 %v96
  %v283 = vpop.f32.mrb[0].mxu0
  %v284 = vadd.f32 %v53, %v283
  %v285 = vpop.f32.mrb[0].mxu0
  %286 = vmatprep.mubr.f32.mxu0 0.0
  %287 = vmatmul.mubr.f32.gmra.mrb[0].mxu0 %v99
  %v288 = vpop.f32.mrb[0].mxu0
  %v289 = vadd.f32 %v53, %v288
  %v290 = vpop.f32.mrb[0].mxu0
  %291 = vmatprep.mubr.f32.mxu0 0.0
  %292 = vmatmul.mubr.f32.gmra.mrb[0].mxu0 %v102
  %v293 = vpop.f32.mrb[0].mxu0
  %v294 = vadd.f32 %v53, %v293
  %v295 = vpop.f32.mrb[0].mxu0
  %296 = vmatprep.mubr.f32.mxu0 0.0
  %297 = vmatmul.mubr.f32.gmra.mrb[0].mxu0 %v105
  %v298 = vpop.f32.mrb[0].mxu0
  %v299 = vadd.f32 %v53, %v298
  %v300 = vpop.f32.mrb[0].mxu0
  %301 = vmatprep.mubr.f32.mxu0 0.0
  %302 = vmatmul.mubr.f32.gmra.mrb[0].mxu0 %v108
  %v303 = vpop.f32.mrb[0].mxu0
  %v304 = vadd.f32 %v53, %v303
  %v305 = vpop.f32.mrb[0].mxu0
  %306 = vmatprep.mubr.f32.mxu0 0.0
  %307 = vmatmul.mubr.f32.gmra.mrb[0].mxu0 %v111
  %v308 = vpop.f32.mrb[0].mxu0
  %v309 = vadd.f32 %v53, %v308
  %v310 = vpop.f32.mrb[0].mxu0
  %311 = vmatprep.mubr.f32.mxu0 0.0
  %312 = vmatmul.mubr.f32.gmra.mrb[0].mxu0 %v114
  %v313 = vpop.f32.mrb[0].mxu0
  %v314 = vadd.f32 %v53, %v313
  %v315 = vpop.f32.mrb[0].mxu0
  %316 = vmatprep.mubr.f32.mxu0 0.0
  %317 = vmatmul.mubr.f32.gmra.mrb[0].mxu0 %v117
  %v318 = vpop.f32.mrb[0].mxu0
  %v319 = vadd.f32 %v53, %v318
  %v320 = vpop.f32.mrb[0].mxu0
  %321 = vmatprep.mubr.f32.mxu0 0.0
  %322 = vmatmul.mubr.f32.gmra.mrb[0].mxu0 %v120
  %v323 = vpop.f32.mrb[0].mxu0
  %v324 = vadd.f32 %v53, %v323
  %v325 = vpop.f32.mrb[0].mxu0
  %326 = vmatprep.mubr.f32.mxu0 0.0
  %327 = vmatmul.mubr.f32.gmra.mrb[0].mxu0 %v123
  %v328 = vpop.f32.mrb[0].mxu0
  %v329 = vadd.f32 %v53, %v328
  %v330 = vpop.f32.mrb[0].mxu0
  %331 = vmatprep.mubr.f32.mxu0 0.0
  %332 = vmatmul.mubr.f32.gmra.mrb[0].mxu0 %v126
  %v333 = vpop.f32.mrb[0].mxu0
  %v334 = vadd.f32 %v53, %v333
  %v335 = vpop.f32.mrb[0].mxu0
  %336 = vmatprep.mubr.f32.mxu0 0.0
  %337 = vmatmul.mubr.f32.gmra.mrb[0].mxu0 %v129
  %v338 = vpop.f32.mrb[0].mxu0
  %v339 = vadd.f32 %v53, %v338
  %v340 = vpop.f32.mrb[0].mxu0
  %341 = vmatprep.mubr.f32.mxu0 0.0
  %342 = vmatmul.mubr.f32.gmra.mrb[0].mxu0 %v132
  %v343 = vpop.f32.mrb[0].mxu0
  %v344 = vadd.f32 %v53, %v343
  %v345 = vpop.f32.mrb[0].mxu0
  %346 = vmatprep.mubr.f32.mxu0 0.0
  %347 = vmatmul.mubr.f32.gmra.mrb[0].mxu0 %v135
  %v348 = vpop.f32.mrb[0].mxu0
  %v349 = vadd.f32 %v53, %v348
  %v350 = vpop.f32.mrb[0].mxu0
  %351 = vmatprep.mubr.f32.mxu0 0.0
  %352 = vmatmul.mubr.f32.gmra.mrb[0].mxu0 %v138
  %v353 = vpop.f32.mrb[0].mxu0
  %v354 = vadd.f32 %v53, %v353
  %v355 = vpop.f32.mrb[0].mxu0
  %356 = vmatprep.mubr.f32.mxu0 0.0
  %357 = vmatmul.mubr.f32.gmra.mrb[0].mxu0 %v141
  %v358 = vpop.f32.mrb[0].mxu0
  %v359 = vadd.f32 %v53, %v358
  %v360 = vpop.f32.mrb[0].mxu0
  %361 = vmatprep.mubr.f32.mxu0 0.0
  %362 = vmatmul.mubr.f32.gmra.mrb[0].mxu0 %v144
  %v363 = vpop.f32.mrb[0].mxu0
  %v364 = vadd.f32 %v53, %v363
  %v365 = vpop.f32.mrb[0].mxu0
  %366 = vmatprep.mubr.f32.mxu0 0.0
  %367 = vmatmul.mubr.f32.gmra.mrb[0].mxu0 %v147
  %v368 = vpop.f32.mrb[0].mxu0
  %v369 = vadd.f32 %v53, %v368
  %v370 = vpop.f32.mrb[0].mxu0
  %371 = vmatprep.mubr.f32.mxu0 0.0
  %372 = vmatmul.mubr.f32.gmra.mrb[0].mxu0 %v150
  %v373 = vpop.f32.mrb[0].mxu0
  %v374 = vadd.f32 %v53, %v373
  %v375 = vpop.f32.mrb[0].mxu0
  %376 = vdwg.mxu0
  %v377 = vmax.f32 %v219, 0.0
  %v378 = vmax.f32 %v224, 0.0
  %v379 = vmax.f32 %v229, 0.0
  %v380 = vmax.f32 %v234, 0.0
  %v381 = vmax.f32 %v239, 0.0
  %v382 = vmax.f32 %v244, 0.0
  %v383 = vmax.f32 %v249, 0.0
  %v384 = vmax.f32 %v254, 0.0
  %v385 = vmax.f32 %v259, 0.0
  %v386 = vmax.f32 %v264, 0.0
  %v387 = vmax.f32 %v269, 0.0
  %v388 = vmax.f32 %v274, 0.0
  %v389 = vmax.f32 %v279, 0.0
  %v390 = vmax.f32 %v284, 0.0
  %v391 = vmax.f32 %v289, 0.0
  %v392 = vmax.f32 %v294, 0.0
  %v393 = vmax.f32 %v299, 0.0
  %v394 = vmax.f32 %v304, 0.0
  %v395 = vmax.f32 %v309, 0.0
  %v396 = vmax.f32 %v314, 0.0
  %v397 = vmax.f32 %v319, 0.0
  %v398 = vmax.f32 %v324, 0.0
  %v399 = vmax.f32 %v329, 0.0
  %v400 = vmax.f32 %v334, 0.0
  %v401 = vmax.f32 %v339, 0.0
  %v402 = vmax.f32 %v344, 0.0
  %v403 = vmax.f32 %v349, 0.0
  %v404 = vmax.f32 %v354, 0.0
  %v405 = vmax.f32 %v359, 0.0
  %v406 = vmax.f32 %v364, 0.0
  %v407 = vmax.f32 %v369, 0.0
  %v408 = vmax.f32 %v374, 0.0
  %vm409 = vcmask 64512
  %410 = vst.msk [vmem:[%s3] sm:$0xff] %vm409, %v377
  %411 = vst.msk [vmem:[%s3 + $0x8] sm:$0xff] %vm409, %v378
  %412 = vst.msk [vmem:[%s3 + $0x10] sm:$0xff] %vm409, %v379
  %413 = vst.msk [vmem:[%s3 + $0x18] sm:$0xff] %vm409, %v380
  %414 = vst.msk [vmem:[%s3 + $0x20] sm:$0xff] %vm409, %v381
  %415 = vst.msk [vmem:[%s3 + $0x28] sm:$0xff] %vm409, %v382
  %416 = vst.msk [vmem:[%s3 + $0x30] sm:$0xff] %vm409, %v383
  %417 = vst.msk [vmem:[%s3 + $0x38] sm:$0xff] %vm409, %v384
  %418 = vst.msk [vmem:[%s3 + $0x40] sm:$0xff] %vm409, %v385
  %419 = vst.msk [vmem:[%s3 + $0x48] sm:$0xff] %vm409, %v386
  %420 = vst.msk [vmem:[%s3 + $0x50] sm:$0xff] %vm409, %v387
  %421 = vst.msk [vmem:[%s3 + $0x58] sm:$0xff] %vm409, %v388
  %422 = vst.msk [vmem:[%s3 + $0x60] sm:$0xff] %vm409, %v389
  %423 = vst.msk [vmem:[%s3 + $0x68] sm:$0xff] %vm409, %v390
  %424 = vst.msk [vmem:[%s3 + $0x70] sm:$0xff] %vm409, %v391
  %425 = vst.msk [vmem:[%s3 + $0x78] sm:$0xff] %vm409, %v392
  %426 = vst.msk [vmem:[%s3 + $0x80] sm:$0xff] %vm409, %v393
  %427 = vst.msk [vmem:[%s3 + $0x88] sm:$0xff] %vm409, %v394
  %428 = vst.msk [vmem:[%s3 + $0x90] sm:$0xff] %vm409, %v395
  %429 = vst.msk [vmem:[%s3 + $0x98] sm:$0xff] %vm409, %v396
  %430 = vst.msk [vmem:[%s3 + $0xa0] sm:$0xff] %vm409, %v397
  %431 = vst.msk [vmem:[%s3 + $0xa8] sm:$0xff] %vm409, %v398
  %432 = vst.msk [vmem:[%s3 + $0xb0] sm:$0xff] %vm409, %v399
  %433 = vst.msk [vmem:[%s3 + $0xb8] sm:$0xff] %vm409, %v400
  %434 = vst.msk [vmem:[%s3 + $0xc0] sm:$0xff] %vm409, %v401
  %435 = vst.msk [vmem:[%s3 + $0xc8] sm:$0xff] %vm409, %v402
  %436 = vst.msk [vmem:[%s3 + $0xd0] sm:$0xff] %vm409, %v403
  %437 = vst.msk [vmem:[%s3 + $0xd8] sm:$0xff] %vm409, %v404
  %438 = vst.msk [vmem:[%s3 + $0xe0] sm:$0xff] %vm409, %v405
  %439 = vst.msk [vmem:[%s3 + $0xe8] sm:$0xff] %vm409, %v406
  %440 = vst.msk [vmem:[%s3 + $0xf0] sm:$0xff] %vm409, %v407
  %441 = vst.msk [vmem:[%s3 + $0xf8] sm:$0xff] %vm409, %v408
  // Predicated region
  $region14: #{tpu_custom_call.1} parent=0 // pred_check
    _
  $region15: #{tpu_custom_call.1} parent=0 // pred_check_branch
    %443 = sbr.rel (0) target = $region17
  $region16: #{tpu_custom_call.1} parent=0 // pred_region
    _
  $region17: #{tpu_custom_call.1} parent=0 // pred_fallthru
    _
  // Predicated region
  $region18: #{tpu_custom_call.1} parent=0 // pred_check
    _
  $region19: #{tpu_custom_call.1} parent=0 // pred_check_branch
    %445 = sbr.rel (0) target = $region21
  $region20: #{tpu_custom_call.1} parent=0 // pred_region
    _
  $region21: #{tpu_custom_call.1} parent=0 // pred_fallthru
    _

</llo_original>
